<compile_context>
chip_gen: v6e
topology: v6e:2x2x1
jax: 0.10.0
libtpu: 0.0.40
codegen_flags: <defaults>
</compile_context>

<pallas_src>
import jax
import jax.numpy as jnp
from jax.experimental import pallas as pl
from jax.experimental.pallas import tpu as pltpu


def _softplus(x):
    # Matches torch.nn.Softplus(beta=1, threshold=20):
    #   x               if x > 20
    #   log1p(exp(x))   otherwise
    e = jnp.exp(jnp.minimum(x, 20.0))
    return jnp.where(x > 20.0, x, jnp.log1p(e))


def decoder_kernel(z_ref, w1_ref, b1_ref, w2_ref, b2_ref, out_ref):
    # fc1 + softplus
    z = z_ref[...]                                       # (TB, z_dim)
    h = jnp.dot(z, w1_ref[...],
                preferred_element_type=jnp.float32)      # (TB, h_dim)
    h = _softplus(h + b1_ref[...])

    # fc2 + sigmoid
    y = jnp.dot(h, w2_ref[...],
                preferred_element_type=jnp.float32)      # (TB, out_dim)
    y = y + b2_ref[...]
    # sigmoid(y) == 0.5 * tanh(0.5 * y) + 0.5  (exact; single EUP op per elem)
    out_ref[...] = (0.5 * jnp.tanh(0.5 * y) + 0.5).astype(out_ref.dtype)


def decoder_forward(z, w1, b1, w2, b2, *, block_b=2048):
    """z: (B, z_dim); w1: (z_dim, h_dim); b1: (1, h_dim);
       w2: (h_dim, out_dim); b2: (1, out_dim) -> (B, out_dim) float32."""
    B, z_dim = z.shape
    h_dim, out_dim = w2.shape

    # Batch tile: either the full batch (any size) or a multiple-of-8 tile.
    tb = min(block_b, B)
    if tb < B:
        tb = -(-tb // 8) * 8                  # round up to multiple of 8
    grid = (pl.cdiv(B, tb),)

    out = pl.pallas_call(
        decoder_kernel,
        out_shape=jax.ShapeDtypeStruct((B, out_dim), jnp.float32),
        grid=grid,
        in_specs=[
            pl.BlockSpec((tb, z_dim), lambda i: (i, 0)),     # z: walks batch
            pl.BlockSpec((z_dim, h_dim), lambda i: (0, 0)),  # w1: resident
            pl.BlockSpec((1, h_dim), lambda i: (0, 0)),      # b1: resident
            pl.BlockSpec((h_dim, out_dim), lambda i: (0, 0)),  # w2: resident
            pl.BlockSpec((1, out_dim), lambda i: (0, 0)),    # b2: resident
        ],
        out_specs=pl.BlockSpec((tb, out_dim), lambda i: (i, 0)),
        compiler_params=pltpu.CompilerParams(
            dimension_semantics=("parallel",),
            vmem_limit_bytes=48 * 1024 * 1024,
        ),
    )(z, w1, b1, w2, b2)
    return out


def init_params(key, z_dim, h_dim, out_dim=784):
    # Deterministic init mimicking nn.Linear's U(-1/sqrt(fan_in), 1/sqrt(fan_in)).
    k1, k2, k3, k4 = jax.random.split(key, 4)
    bound1 = 1.0 / (z_dim ** 0.5)
    bound2 = 1.0 / (h_dim ** 0.5)
    w1 = jax.random.uniform(k1, (z_dim, h_dim), jnp.float32, -bound1, bound1)
    b1 = jax.random.uniform(k2, (1, h_dim), jnp.float32, -bound1, bound1)
    w2 = jax.random.uniform(k3, (h_dim, out_dim), jnp.float32, -bound2, bound2)
    b2 = jax.random.uniform(k4, (1, out_dim), jnp.float32, -bound2, bound2)
    return w1, b1, w2, b2


if __name__ == "__main__":
    z_dim, h_dim, batch = 8, 32, 8

    key = jax.random.PRNGKey(0)
    kz, kp = jax.random.split(key)
    z = jax.random.normal(kz, (batch, z_dim), jnp.float32)
    w1, b1, w2, b2 = init_params(kp, z_dim, h_dim)

    out = decoder_forward(z, w1, b1, w2, b2)
    jax.block_until_ready(out)

    # sanity check against plain-JAX reference
    ref_h = _softplus(z @ w1 + b1)
    ref = jax.nn.sigmoid(ref_h @ w2 + b2)
    assert out.shape == (batch, 784)
    assert jnp.allclose(out, ref, atol=1e-5, rtol=1e-5), float(
        jnp.max(jnp.abs(out - ref)))

    print("KERNEL_OK")
</pallas_src>

<mosaic_0001>
module attributes {stable_mosaic.version = 11 : i64} {
  func.func @decoder_kernel(%arg0: i32, %arg1: memref<8x8xf32, #tpu.memory_space<vmem>>, %arg2: memref<8x32xf32, #tpu.memory_space<vmem>>, %arg3: memref<1x32xf32, #tpu.memory_space<vmem>>, %arg4: memref<32x784xf32, #tpu.memory_space<vmem>>, %arg5: memref<1x784xf32, #tpu.memory_space<vmem>>, %arg6: memref<8x784xf32, #tpu.memory_space<vmem>>) attributes {dimension_semantics = [#tpu.dimension_semantics<parallel>], iteration_bounds = array<i64: 1>, scalar_prefetch = 0 : i64, scratch_operands = 0 : i64, tpu.core_type = #tpu.core_type<tc>, window_params = [{transform_indices = @transform_0, window_bounds = array<i64: 8, 8>}, {pipeline_mode = #tpu.pipeline_mode<synchronous>, transform_indices = @transform_1, window_bounds = array<i64: 8, 32>}, {pipeline_mode = #tpu.pipeline_mode<synchronous>, transform_indices = @transform_2, window_bounds = array<i64: 1, 32>}, {pipeline_mode = #tpu.pipeline_mode<synchronous>, transform_indices = @transform_3, window_bounds = array<i64: 32, 784>}, {pipeline_mode = #tpu.pipeline_mode<synchronous>, transform_indices = @transform_4, window_bounds = array<i64: 1, 784>}, {transform_indices = @transform_5, window_bounds = array<i64: 8, 784>}]} {
    %c0 = arith.constant 0 : index
    %c0_0 = arith.constant 0 : index
    %0 = vector.load %arg1[%c0, %c0_0] : memref<8x8xf32, #tpu.memory_space<vmem>>, vector<8x8xf32>
    %c0_1 = arith.constant 0 : index
    %c0_2 = arith.constant 0 : index
    %1 = vector.load %arg2[%c0_1, %c0_2] : memref<8x32xf32, #tpu.memory_space<vmem>>, vector<8x32xf32>
    %cst = arith.constant dense<0.000000e+00> : vector<8x32xf32>
    %2 = tpu.matmul %0, %1, %cst {dimension_numbers = #tpu.dot_dimension_numbers<[1], [0], [0], [1], [0, 0, 1, 1], [], []>} : vector<8x8xf32>, vector<8x32xf32>, vector<8x32xf32> -> vector<8x32xf32>
    %c0_3 = arith.constant 0 : index
    %c0_4 = arith.constant 0 : index
    %3 = vector.load %arg3[%c0_3, %c0_4] : memref<1x32xf32, #tpu.memory_space<vmem>>, vector<1x32xf32>
    %4 = vector.broadcast %3 : vector<1x32xf32> to vector<8x32xf32>
    %5 = arith.addf %2, %4 : vector<8x32xf32>
    %cst_5 = arith.constant 2.000000e+01 : f32
    %6 = vector.broadcast %cst_5 : f32 to vector<8x32xf32>
    %7 = arith.minimumf %5, %6 : vector<8x32xf32>
    %8 = math.exp %7 : vector<8x32xf32>
    %cst_6 = arith.constant 2.000000e+01 : f32
    %9 = vector.broadcast %cst_6 : f32 to vector<8x32xf32>
    %10 = arith.cmpf ogt, %5, %9 : vector<8x32xf32>
    %11 = math.log1p %8 : vector<8x32xf32>
    %12 = arith.select %10, %5, %11 : vector<8x32xi1>, vector<8x32xf32>
    %c0_7 = arith.constant 0 : index
    %c0_8 = arith.constant 0 : index
    %13 = vector.load %arg4[%c0_7, %c0_8] : memref<32x784xf32, #tpu.memory_space<vmem>>, vector<32x784xf32>
    %cst_9 = arith.constant dense<0.000000e+00> : vector<8x784xf32>
    %14 = tpu.matmul %12, %13, %cst_9 {dimension_numbers = #tpu.dot_dimension_numbers<[1], [0], [0], [1], [0, 0, 1, 1], [], []>} : vector<8x32xf32>, vector<32x784xf32>, vector<8x784xf32> -> vector<8x784xf32>
    %c0_10 = arith.constant 0 : index
    %c0_11 = arith.constant 0 : index
    %15 = vector.load %arg5[%c0_10, %c0_11] : memref<1x784xf32, #tpu.memory_space<vmem>>, vector<1x784xf32>
    %16 = vector.broadcast %15 : vector<1x784xf32> to vector<8x784xf32>
    %17 = arith.addf %14, %16 : vector<8x784xf32>
    %cst_12 = arith.constant 5.000000e-01 : f32
    %18 = vector.broadcast %cst_12 : f32 to vector<8x784xf32>
    %19 = arith.mulf %18, %17 : vector<8x784xf32>
    %20 = math.tanh %19 : vector<8x784xf32>
    %cst_13 = arith.constant 5.000000e-01 : f32
    %21 = vector.broadcast %cst_13 : f32 to vector<8x784xf32>
    %22 = arith.mulf %21, %20 : vector<8x784xf32>
    %cst_14 = arith.constant 5.000000e-01 : f32
    %23 = vector.broadcast %cst_14 : f32 to vector<8x784xf32>
    %24 = arith.addf %22, %23 : vector<8x784xf32>
    %c0_15 = arith.constant 0 : index
    %c0_16 = arith.constant 0 : index
    %25 = vector.load %arg6[%c0_15, %c0_16] : memref<8x784xf32, #tpu.memory_space<vmem>>, vector<8x784xf32>
    tpu.vector_store %arg6[%c0_15, %c0_16], %24 {strides = array<i32>} : memref<8x784xf32, #tpu.memory_space<vmem>>, vector<8x784xf32>,
    return
  }
  func.func @transform_0(%arg0: i32) -> (i32, i32) {
    %c0_i32 = arith.constant 0 : i32
    %c0_i32_0 = arith.constant 0 : i32
    return %arg0, %c0_i32 : i32, i32
  }
  func.func @transform_1(%arg0: i32) -> (i32, i32) {
    %c0_i32 = arith.constant 0 : i32
    %c0_i32_0 = arith.constant 0 : i32
    %c0_i32_1 = arith.constant 0 : i32
    return %c0_i32, %c0_i32_0 : i32, i32
  }
  func.func @transform_2(%arg0: i32) -> (i32, i32) {
    %c0_i32 = arith.constant 0 : i32
    %c0_i32_0 = arith.constant 0 : i32
    %c0_i32_1 = arith.constant 0 : i32
    return %c0_i32, %c0_i32_0 : i32, i32
  }
  func.func @transform_3(%arg0: i32) -> (i32, i32) {
    %c0_i32 = arith.constant 0 : i32
    %c0_i32_0 = arith.constant 0 : i32
    %c0_i32_1 = arith.constant 0 : i32
    return %c0_i32, %c0_i32_0 : i32, i32
  }
  func.func @transform_4(%arg0: i32) -> (i32, i32) {
    %c0_i32 = arith.constant 0 : i32
    %c0_i32_0 = arith.constant 0 : i32
    %c0_i32_1 = arith.constant 0 : i32
    return %c0_i32, %c0_i32_0 : i32, i32
  }
  func.func @transform_5(%arg0: i32) -> (i32, i32) {
    %c0_i32 = arith.constant 0 : i32
    %c0_i32_0 = arith.constant 0 : i32
    return %arg0, %c0_i32 : i32, i32
  }
}

</mosaic_0001>

<llo_original>
// kernel: tpu_custom_call.1
$region0: #{tpu_custom_call.1}
  #allocation0 [shape = 'u32[]', space=smem, size = 0x4, offset = 0x4, fixed_abs, tag = 'smem constant byte address 0x4 - core index']
  #allocation1 [shape = 'u32[144,128]{1,0:T(1,128)}', space=vmem, size = 0x12000, scoped, tag = 'internal scratch']
  %s0 = inlined_call_operand.hbm [shape: f32[8,8], index: 0, kind: input, shape index: {}]
  %s1 = inlined_call_operand.hbm [shape: f32[8,32], index: 1, kind: input, shape index: {}]
  %s2 = inlined_call_operand.hbm [shape: f32[1,32], index: 2, kind: input, shape index: {}]
  %s3 = inlined_call_operand.hbm [shape: f32[32,784], index: 3, kind: input, shape index: {}]
  %s4 = inlined_call_operand.vmem [shape: f32[1,784], index: 4, kind: input, shape index: {}]
  %s5 = inlined_call_operand.hbm [shape: f32[8,784], index: 5, kind: output, shape index: {}]
  %s6 = sld [smem:[#allocation0]]
  $region46: #{tpu_custom_call.1} parent=0
    _
  %s8 = ssub.s32 1, %s6
  %s9 = scalar_select 0, %s8, %s6
  $region1: #{tpu_custom_call.1} parent=0
    #allocation2 [shape = 'u8[4096]{0}', space=vmem, size = 0x1000, scoped, tag = 'input window, operand 0, single buffered']
    #allocation3 [shape = 's32[1]{0}', space=sflag, size = 0x4, scoped, tag = 'scoped memory for tpu_custom_call.1']
    #allocation4 [shape = 's32[1]{0}', space=sflag, size = 0x4, scoped, tag = 'scoped memory for tpu_custom_call.1']
    #allocation5 [shape = 'u8[4096]{0}', space=vmem, size = 0x1000, scoped, tag = 'input window, operand 1, single buffered']
    #allocation6 [shape = 's32[1]{0}', space=sflag, size = 0x4, scoped, tag = 'scoped memory for tpu_custom_call.1']
    #allocation7 [shape = 'u8[512]{0}', space=vmem, size = 0x400, scoped, tag = 'input window, operand 2, single buffered']
    #allocation8 [shape = 'u8[114688]{0}', space=vmem, size = 0x1c000, scoped, tag = 'input window, operand 3, single buffered']
    #allocation9 [shape = 's32[1]{0}', space=sflag, size = 0x4, scoped, tag = 'scoped memory for tpu_custom_call.1']
    #allocation10 [shape = 'u8[28672]{0}', space=vmem, size = 0x7000, scoped, tag = 'output window, operand 0, single buffered']
    %10 = vsyncpa [#allocation3], 0
    %11 = vsyncpa [#allocation6], 0
    %12 = vsyncpa [#allocation9], 0
    %13 = vsyncpa [#allocation4], 0
    // Predicated region
    $region2: #{tpu_custom_call.1} parent=1 // pred_check
      _
    $region3: #{tpu_custom_call.1} parent=1 // pred_check_branch
      %15 = sbr.rel (0) target = $region5
    $region4: #{tpu_custom_call.1} parent=1 // pred_region
      %s17 = ssub.s32 128, 128
      %18 = vsyncadd [#allocation3], %s17
      %s20 = sshll.u32 [#allocation2], 4
      %s21 = int_to_ptr.vmem [resolvable:$true] %s20
      %23 = dma.hbm_to_vmem [thread:$0]  %s0, 128, %s21, [#allocation3]
    $region5: #{tpu_custom_call.1} parent=1 // pred_fallthru
      _
    // Predicated region
    $region6: #{tpu_custom_call.1} parent=1 // pred_check
      _
    $region7: #{tpu_custom_call.1} parent=1 // pred_check_branch
      %25 = sbr.rel (0) target = $region9
    $region8: #{tpu_custom_call.1} parent=1 // pred_region
      %s27 = ssub.s32 128, 128
      %28 = vsyncadd [#allocation6], %s27
      %s30 = sshll.u32 [#allocation5], 4
      %s31 = int_to_ptr.vmem [resolvable:$true] %s30
      %33 = dma.hbm_to_vmem [thread:$0]  %s1, 128, %s31, [#allocation6]
    $region9: #{tpu_custom_call.1} parent=1 // pred_fallthru
      _
    // Predicated region
    $region10: #{tpu_custom_call.1} parent=1 // pred_check
      _
    $region11: #{tpu_custom_call.1} parent=1 // pred_check_branch
      %35 = sbr.rel (0) target = $region13
    $region12: #{tpu_custom_call.1} parent=1 // pred_region
      %s37 = ssub.s32 16, 16
      %38 = vsyncadd [#allocation6], %s37
      %s40 = sshll.u32 [#allocation7], 4
      %s41 = int_to_ptr.vmem [resolvable:$true] %s40
      %43 = dma.hbm_to_vmem [thread:$0]  %s2, 16, %s41, [#allocation6]
    $region13: #{tpu_custom_call.1} parent=1 // pred_fallthru
      _
    // Predicated region
    $region14: #{tpu_custom_call.1} parent=1 // pred_check
      _
    $region15: #{tpu_custom_call.1} parent=1 // pred_check_branch
      %45 = sbr.rel (0) target = $region17
    $region16: #{tpu_custom_call.1} parent=1 // pred_region
      %s47 = ssub.s32 3584, 3584
      %48 = vsyncadd [#allocation9], %s47
      %s49 = sshll.u32 [#allocation8], 4
      %s50 = int_to_ptr.vmem [resolvable:$true] %s49
      %55 = dma.hbm_to_vmem [thread:$0]  %s3, 3584, %s50, [#allocation9], 896, 896, 56
    $region17: #{tpu_custom_call.1} parent=1 // pred_fallthru
      _
    // Predicated region
    $region18: #{tpu_custom_call.1} parent=1 // pred_check
      _
    $region19: #{tpu_custom_call.1} parent=1 // pred_check_branch
      %57 = sbr.rel (0) target = $region21
    $region20: #{tpu_custom_call.1} parent=1 // pred_region
      _
    $region21: #{tpu_custom_call.1} parent=1 // pred_fallthru
      _
    // Predicated region
    $region22: #{tpu_custom_call.1} parent=1 // pred_check
      _
    $region23: #{tpu_custom_call.1} parent=1 // pred_check_branch
      %59 = sbr.rel (0) target = $region25
    $region24: #{tpu_custom_call.1} parent=1 // pred_region
      %60 = dma.done [#allocation3], 128
    $region25: #{tpu_custom_call.1} parent=1 // pred_fallthru
      _
    // Predicated region
    $region26: #{tpu_custom_call.1} parent=1 // pred_check
      _
    $region27: #{tpu_custom_call.1} parent=1 // pred_check_branch
      %62 = sbr.rel (0) target = $region29
    $region28: #{tpu_custom_call.1} parent=1 // pred_region
      %63 = dma.done [#allocation6], 128
    $region29: #{tpu_custom_call.1} parent=1 // pred_fallthru
      _
    // Predicated region
    $region30: #{tpu_custom_call.1} parent=1 // pred_check
      _
    $region31: #{tpu_custom_call.1} parent=1 // pred_check_branch
      %65 = sbr.rel (0) target = $region33
    $region32: #{tpu_custom_call.1} parent=1 // pred_region
      %66 = dma.done [#allocation6], 16
    $region33: #{tpu_custom_call.1} parent=1 // pred_fallthru
      _
    // Predicated region
    $region34: #{tpu_custom_call.1} parent=1 // pred_check
      _
    $region35: #{tpu_custom_call.1} parent=1 // pred_check_branch
      %68 = sbr.rel (0) target = $region37
    $region36: #{tpu_custom_call.1} parent=1 // pred_region
      %69 = dma.done [#allocation9], 3584
    $region37: #{tpu_custom_call.1} parent=1 // pred_fallthru
      _
    %v70 = vld [vmem:[#allocation2] sm:$0xff]
    %v71 = vld [vmem:[#allocation5] sm:$0xff]
    %v72 = vld [vmem:[#allocation7] sm:$0x1]
    %v74 = vlaneseq
    %v75 = vshrl.u32 %v74, 7
    %v76 = vsub.s32 0, %v75
    %v77 = vrot.slane %v72, %v76
    %vm79 = vcmask 64512
    %v81 = vsel %vm79, %v70, 0
    %83 = vmatprep.subr.mxu0 0.0
    %84 = vmatpush1.msra.mxu0 0.0
    %85 = vmatprep.subr.mxu0 0.0
    %86 = vmatpush1.msra.mxu0 0.0
    %87 = vmatprep.subr.mxu0 0.0
    %88 = vmatpush1.msra.mxu0 0.0
    %89 = vmatprep.subr.mxu0 0.0
    %90 = vmatpush1.msra.mxu0 0.0
    %91 = vmatprep.subr.mxu0 0.0
    %92 = vmatpush1.msra.mxu0 0.0
    %93 = vmatprep.subr.mxu0 0.0
    %94 = vmatpush1.msra.mxu0 0.0
    %95 = vmatprep.subr.mxu0 0.0
    %96 = vmatpush1.msra.mxu0 0.0
    %97 = vmatprep.subr.mxu0 0.0
    %98 = vmatpush1.msra.mxu0 0.0
    %99 = vmatprep.subr.mxu0 0.0
    %100 = vmatpush1.msra.mxu0 0.0
    %101 = vmatprep.subr.mxu0 0.0
    %102 = vmatpush1.msra.mxu0 0.0
    %103 = vmatprep.subr.mxu0 0.0
    %104 = vmatpush1.msra.mxu0 0.0
    %105 = vmatprep.subr.mxu0 0.0
    %106 = vmatpush1.msra.mxu0 0.0
    %107 = vmatprep.subr.mxu0 0.0
    %108 = vmatpush1.msra.mxu0 0.0
    %109 = vmatprep.subr.mxu0 0.0
    %110 = vmatpush1.msra.mxu0 0.0
    %111 = vmatprep.subr.mxu0 0.0
    %112 = vmatpush1.msra.mxu0 0.0
    %113 = vmatprep.subr.mxu0 0.0
    %114 = vmatpush1.msra.mxu0 %v71
    %115 = vmatprep.subr.mxu0 0.0
    %116 = vmatpush2.msra.mxu0 0.0
    %117 = vmatprep.subr.mxu0 0.0
    %118 = vmatpush2.msra.mxu0 0.0
    %119 = vmatprep.subr.mxu0 0.0
    %120 = vmatpush2.msra.mxu0 0.0
    %121 = vmatprep.subr.mxu0 0.0
    %122 = vmatpush2.msra.mxu0 0.0
    %123 = vmatprep.subr.mxu0 0.0
    %124 = vmatpush2.msra.mxu0 0.0
    %125 = vmatprep.subr.mxu0 0.0
    %126 = vmatpush2.msra.mxu0 0.0
    %127 = vmatprep.subr.mxu0 0.0
    %128 = vmatpush2.msra.mxu0 0.0
    %129 = vmatprep.subr.mxu0 0.0
    %130 = vmatpush2.msra.mxu0 0.0
    %131 = vmatprep.subr.mxu0 0.0
    %132 = vmatpush2.msra.mxu0 0.0
    %133 = vmatprep.subr.mxu0 0.0
    %134 = vmatpush2.msra.mxu0 0.0
    %135 = vmatprep.subr.mxu0 0.0
    %136 = vmatpush2.msra.mxu0 0.0
    %137 = vmatprep.subr.mxu0 0.0
    %138 = vmatpush2.msra.mxu0 0.0
    %139 = vmatprep.subr.mxu0 0.0
    %140 = vmatpush2.msra.mxu0 0.0
    %141 = vmatprep.subr.mxu0 0.0
    %142 = vmatpush2.msra.mxu0 0.0
    %143 = vmatprep.subr.mxu0 0.0
    %144 = vmatpush2.msra.mxu0 0.0
    %145 = vmatprep.subr.mxu0 0.0
    %146 = vmatpush2.msra.mxu0 0.0
    %147 = vmatprep.mubr.f32.mxu0 0.0
    %148 = vmatmul.mubr.f32.gmra.mxu0 %v81
    %v149 = vpop.f32.mrf.mxu0
    %v150 = vadd.f32 %v77, %v149
    %v151 = vpop.f32.mrf.mxu0
    %152 = vdwg.mxu0
    %v153 = vmin.f32 %v150, 20.0
    %v154 = vmul.f32 %v153, 1.442695
    %v155 = vpow.pop %v154
    %vm156 = vcmp.gt.f32.partialorder %v150, 20.0
    %v157 = vadd.f32 %v155, 1.0
    %v158 = vlog2.pop %v157
    %v159 = vmul.f32 %v158, 0.6931472
    %v160 = vmul.f32 -0.5, %v155
    %v161 = vadd.f32 %v160, 1.0
    %v162 = vmul.f32 %v161, %v155
    %v163 = vand.u32 2147483647, %v155
    %vm164 = vcmp.lt.f32.partialorder %v163, 0.0004427343
    %v165 = vsel %vm164, %v162, %v159
    %v166 = vsel %vm156, %v150, %v165
    %v167 = vld [vmem:[#allocation8] sm:$0xff]
    %v168 = vld [vmem:[#allocation8 + $0x8] sm:$0xff]
    %v169 = vld [vmem:[#allocation8 + $0x10] sm:$0xff]
    %v170 = vld [vmem:[#allocation8 + $0x18] sm:$0xff]
    %v171 = vld [vmem:[#allocation8 + $0x20] sm:$0xff]
    %v172 = vld [vmem:[#allocation8 + $0x28] sm:$0xff]
    %v173 = vld [vmem:[#allocation8 + $0x30] sm:$0xff]
    %v174 = vld [vmem:[#allocation8 + $0x38] sm:$0xff]
    %v175 = vld [vmem:[#allocation8 + $0x40] sm:$0xff]
    %v176 = vld [vmem:[#allocation8 + $0x48] sm:$0xff]
    %v177 = vld [vmem:[#allocation8 + $0x50] sm:$0xff]
    %v178 = vld [vmem:[#allocation8 + $0x58] sm:$0xff]
    %v179 = vld [vmem:[#allocation8 + $0x60] sm:$0xff]
    %v180 = vld [vmem:[#allocation8 + $0x68] sm:$0xff]
    %v181 = vld [vmem:[#allocation8 + $0x70] sm:$0xff]
    %v182 = vld [vmem:[#allocation8 + $0x78] sm:$0xff]
    %v183 = vld [vmem:[#allocation8 + $0x80] sm:$0xff]
    %v184 = vld [vmem:[#allocation8 + $0x88] sm:$0xff]
    %v185 = vld [vmem:[#allocation8 + $0x90] sm:$0xff]
    %v186 = vld [vmem:[#allocation8 + $0x98] sm:$0xff]
    %v187 = vld [vmem:[#allocation8 + $0xa0] sm:$0xff]
    %v188 = vld [vmem:[#allocation8 + $0xa8] sm:$0xff]
    %v189 = vld [vmem:[#allocation8 + $0xb0] sm:$0xff]
    %v190 = vld [vmem:[#allocation8 + $0xb8] sm:$0xff]
    %v191 = vld [vmem:[#allocation8 + $0xc0] sm:$0xff]
    %v192 = vld [vmem:[#allocation8 + $0xc8] sm:$0xff]
    %v193 = vld [vmem:[#allocation8 + $0xd0] sm:$0xff]
    %v194 = vld [vmem:[#allocation8 + $0xd8] sm:$0xff]
    %v195 = vld [vmem:[%s4] sm:$0x7f]
    %v197 = vlaneseq
    %v198 = vshrl.u32 %v197, 7
    %v199 = vsub.s32 0, %v198
    %v200 = vrot.slane %v195, %v199
    %v201 = vlaneseq
    %v202 = vshrl.u32 %v201, 7
    %v203 = vsub.s32 1, %v202
    %v204 = vrot.slane %v195, %v203
    %v205 = vlaneseq
    %v206 = vshrl.u32 %v205, 7
    %v207 = vsub.s32 2, %v206
    %v208 = vrot.slane %v195, %v207
    %v209 = vlaneseq
    %v210 = vshrl.u32 %v209, 7
    %v211 = vsub.s32 3, %v210
    %v212 = vrot.slane %v195, %v211
    %v213 = vlaneseq
    %v214 = vshrl.u32 %v213, 7
    %v215 = vsub.s32 4, %v214
    %v216 = vrot.slane %v195, %v215
    %v217 = vlaneseq
    %v218 = vshrl.u32 %v217, 7
    %v219 = vsub.s32 5, %v218
    %v220 = vrot.slane %v195, %v219
    %v221 = vlaneseq
    %v222 = vshrl.u32 %v221, 7
    %v223 = vsub.s32 6, %v222
    %v224 = vrot.slane %v195, %v223
    %vm232 = vcmask 261120
    %v234 = vsel %vm232, %v166, 0
    %236 = vmatprep.subr.mxu0 0.0
    %237 = vmatpush1.msra.mxu0 0.0
    %238 = vmatprep.subr.mxu0 0.0
    %239 = vmatpush1.msra.mxu0 0.0
    %240 = vmatprep.subr.mxu0 0.0
    %241 = vmatpush1.msra.mxu0 0.0
    %242 = vmatprep.subr.mxu0 0.0
    %243 = vmatpush1.msra.mxu0 0.0
    %244 = vmatprep.subr.mxu0 0.0
    %245 = vmatpush1.msra.mxu0 0.0
    %246 = vmatprep.subr.mxu0 0.0
    %247 = vmatpush1.msra.mxu0 0.0
    %248 = vmatprep.subr.mxu0 0.0
    %249 = vmatpush1.msra.mxu0 0.0
    %250 = vmatprep.subr.mxu0 0.0
    %251 = vmatpush1.msra.mxu0 0.0
    %252 = vmatprep.subr.mxu0 0.0
    %253 = vmatpush1.msra.mxu0 0.0
    %254 = vmatprep.subr.mxu0 0.0
    %255 = vmatpush1.msra.mxu0 0.0
    %256 = vmatprep.subr.mxu0 0.0
    %257 = vmatpush1.msra.mxu0 0.0
    %258 = vmatprep.subr.mxu0 0.0
    %259 = vmatpush1.msra.mxu0 0.0
    %260 = vmatprep.subr.mxu0 %v189
    %261 = vmatpush1.msra.mxu0 %v188
    %262 = vmatprep.subr.mxu0 %v182
    %263 = vmatpush1.msra.mxu0 %v181
    %264 = vmatprep.subr.mxu0 %v175
    %265 = vmatpush1.msra.mxu0 %v174
    %266 = vmatprep.subr.mxu0 %v168
    %267 = vmatpush1.msra.mxu0 %v167
    %268 = vmatprep.subr.mxu0 0.0
    %269 = vmatpush2.msra.mxu0 0.0
    %270 = vmatprep.subr.mxu0 0.0
    %271 = vmatpush2.msra.mxu0 0.0
    %272 = vmatprep.subr.mxu0 0.0
    %273 = vmatpush2.msra.mxu0 0.0
    %274 = vmatprep.subr.mxu0 0.0
    %275 = vmatpush2.msra.mxu0 0.0
    %276 = vmatprep.subr.mxu0 0.0
    %277 = vmatpush2.msra.mxu0 0.0
    %278 = vmatprep.subr.mxu0 0.0
    %279 = vmatpush2.msra.mxu0 0.0
    %280 = vmatprep.subr.mxu0 0.0
    %281 = vmatpush2.msra.mxu0 0.0
    %282 = vmatprep.subr.mxu0 0.0
    %283 = vmatpush2.msra.mxu0 0.0
    %284 = vmatprep.subr.mxu0 0.0
    %285 = vmatpush2.msra.mxu0 0.0
    %286 = vmatprep.subr.mxu0 0.0
    %287 = vmatpush2.msra.mxu0 0.0
    %288 = vmatprep.subr.mxu0 0.0
    %289 = vmatpush2.msra.mxu0 0.0
    %290 = vmatprep.subr.mxu0 0.0
    %291 = vmatpush2.msra.mxu0 0.0
    %292 = vmatprep.subr.mxu0 0.0
    %293 = vmatpush2.msra.mxu0 0.0
    %294 = vmatprep.subr.mxu0 0.0
    %295 = vmatpush2.msra.mxu0 0.0
    %296 = vmatprep.subr.mxu0 0.0
    %297 = vmatpush2.msra.mxu0 0.0
    %298 = vmatprep.subr.mxu0 0.0
    %299 = vmatpush2.msra.mxu0 0.0
    %300 = vmatprep.mubr.f32.mxu0 0.0
    %301 = vmatmul.mubr.f32.gmra.mxu0 %v234
    %v302 = vpop.f32.mrf.mxu0
    %v303 = vadd.f32 %v200, %v302
    %v304 = vpop.f32.mrf.mxu0
    %v305 = vadd.f32 %v204, %v304
    %306 = vdwg.mxu0
    %307 = vmatprep.subr.mxu0 0.0
    %308 = vmatpush1.msra.mxu0 0.0
    %309 = vmatprep.subr.mxu0 0.0
    %310 = vmatpush1.msra.mxu0 0.0
    %311 = vmatprep.subr.mxu0 0.0
    %312 = vmatpush1.msra.mxu0 0.0
    %313 = vmatprep.subr.mxu0 0.0
    %314 = vmatpush1.msra.mxu0 0.0
    %315 = vmatprep.subr.mxu0 0.0
    %316 = vmatpush1.msra.mxu0 0.0
    %317 = vmatprep.subr.mxu0 0.0
    %318 = vmatpush1.msra.mxu0 0.0
    %319 = vmatprep.subr.mxu0 0.0
    %320 = vmatpush1.msra.mxu0 0.0
    %321 = vmatprep.subr.mxu0 0.0
    %322 = vmatpush1.msra.mxu0 0.0
    %323 = vmatprep.subr.mxu0 0.0
    %324 = vmatpush1.msra.mxu0 0.0
    %325 = vmatprep.subr.mxu0 0.0
    %326 = vmatpush1.msra.mxu0 0.0
    %327 = vmatprep.subr.mxu0 0.0
    %328 = vmatpush1.msra.mxu0 0.0
    %329 = vmatprep.subr.mxu0 0.0
    %330 = vmatpush1.msra.mxu0 0.0
    %331 = vmatprep.subr.mxu0 %v191
    %332 = vmatpush1.msra.mxu0 %v190
    %333 = vmatprep.subr.mxu0 %v184
    %334 = vmatpush1.msra.mxu0 %v183
    %335 = vmatprep.subr.mxu0 %v177
    %336 = vmatpush1.msra.mxu0 %v176
    %337 = vmatprep.subr.mxu0 %v170
    %338 = vmatpush1.msra.mxu0 %v169
    %339 = vmatprep.subr.mxu0 0.0
    %340 = vmatpush2.msra.mxu0 0.0
    %341 = vmatprep.subr.mxu0 0.0
    %342 = vmatpush2.msra.mxu0 0.0
    %343 = vmatprep.subr.mxu0 0.0
    %344 = vmatpush2.msra.mxu0 0.0
    %345 = vmatprep.subr.mxu0 0.0
    %346 = vmatpush2.msra.mxu0 0.0
    %347 = vmatprep.subr.mxu0 0.0
    %348 = vmatpush2.msra.mxu0 0.0
    %349 = vmatprep.subr.mxu0 0.0
    %350 = vmatpush2.msra.mxu0 0.0
    %351 = vmatprep.subr.mxu0 0.0
    %352 = vmatpush2.msra.mxu0 0.0
    %353 = vmatprep.subr.mxu0 0.0
    %354 = vmatpush2.msra.mxu0 0.0
    %355 = vmatprep.subr.mxu0 0.0
    %356 = vmatpush2.msra.mxu0 0.0
    %357 = vmatprep.subr.mxu0 0.0
    %358 = vmatpush2.msra.mxu0 0.0
    %359 = vmatprep.subr.mxu0 0.0
    %360 = vmatpush2.msra.mxu0 0.0
    %361 = vmatprep.subr.mxu0 0.0
    %362 = vmatpush2.msra.mxu0 0.0
    %363 = vmatprep.subr.mxu0 0.0
    %364 = vmatpush2.msra.mxu0 0.0
    %365 = vmatprep.subr.mxu0 0.0
    %366 = vmatpush2.msra.mxu0 0.0
    %367 = vmatprep.subr.mxu0 0.0
    %368 = vmatpush2.msra.mxu0 0.0
    %369 = vmatprep.subr.mxu0 0.0
    %370 = vmatpush2.msra.mxu0 0.0
    %371 = vmatprep.mubr.f32.mxu0 0.0
    %372 = vmatmul.mubr.f32.gmra.mxu0 %v234
    %v373 = vpop.f32.mrf.mxu0
    %v374 = vadd.f32 %v208, %v373
    %v375 = vpop.f32.mrf.mxu0
    %v376 = vadd.f32 %v212, %v375
    %377 = vdwg.mxu0
    %378 = vmatprep.subr.mxu0 0.0
    %379 = vmatpush1.msra.mxu0 0.0
    %380 = vmatprep.subr.mxu0 0.0
    %381 = vmatpush1.msra.mxu0 0.0
    %382 = vmatprep.subr.mxu0 0.0
    %383 = vmatpush1.msra.mxu0 0.0
    %384 = vmatprep.subr.mxu0 0.0
    %385 = vmatpush1.msra.mxu0 0.0
    %386 = vmatprep.subr.mxu0 0.0
    %387 = vmatpush1.msra.mxu0 0.0
    %388 = vmatprep.subr.mxu0 0.0
    %389 = vmatpush1.msra.mxu0 0.0
    %390 = vmatprep.subr.mxu0 0.0
    %391 = vmatpush1.msra.mxu0 0.0
    %392 = vmatprep.subr.mxu0 0.0
    %393 = vmatpush1.msra.mxu0 0.0
    %394 = vmatprep.subr.mxu0 0.0
    %395 = vmatpush1.msra.mxu0 0.0
    %396 = vmatprep.subr.mxu0 0.0
    %397 = vmatpush1.msra.mxu0 0.0
    %398 = vmatprep.subr.mxu0 0.0
    %399 = vmatpush1.msra.mxu0 0.0
    %400 = vmatprep.subr.mxu0 0.0
    %401 = vmatpush1.msra.mxu0 0.0
    %402 = vmatprep.subr.mxu0 %v193
    %403 = vmatpush1.msra.mxu0 %v192
    %404 = vmatprep.subr.mxu0 %v186
    %405 = vmatpush1.msra.mxu0 %v185
    %406 = vmatprep.subr.mxu0 %v179
    %407 = vmatpush1.msra.mxu0 %v178
    %408 = vmatprep.subr.mxu0 %v172
    %409 = vmatpush1.msra.mxu0 %v171
    %410 = vmatprep.subr.mxu0 0.0
    %411 = vmatpush2.msra.mxu0 0.0
    %412 = vmatprep.subr.mxu0 0.0
    %413 = vmatpush2.msra.mxu0 0.0
    %414 = vmatprep.subr.mxu0 0.0
    %415 = vmatpush2.msra.mxu0 0.0
    %416 = vmatprep.subr.mxu0 0.0
    %417 = vmatpush2.msra.mxu0 0.0
    %418 = vmatprep.subr.mxu0 0.0
    %419 = vmatpush2.msra.mxu0 0.0
    %420 = vmatprep.subr.mxu0 0.0
    %421 = vmatpush2.msra.mxu0 0.0
    %422 = vmatprep.subr.mxu0 0.0
    %423 = vmatpush2.msra.mxu0 0.0
    %424 = vmatprep.subr.mxu0 0.0
    %425 = vmatpush2.msra.mxu0 0.0
    %426 = vmatprep.subr.mxu0 0.0
    %427 = vmatpush2.msra.mxu0 0.0
    %428 = vmatprep.subr.mxu0 0.0
    %429 = vmatpush2.msra.mxu0 0.0
    %430 = vmatprep.subr.mxu0 0.0
    %431 = vmatpush2.msra.mxu0 0.0
    %432 = vmatprep.subr.mxu0 0.0
    %433 = vmatpush2.msra.mxu0 0.0
    %434 = vmatprep.subr.mxu0 0.0
    %435 = vmatpush2.msra.mxu0 0.0
    %436 = vmatprep.subr.mxu0 0.0
    %437 = vmatpush2.msra.mxu0 0.0
    %438 = vmatprep.subr.mxu0 0.0
    %439 = vmatpush2.msra.mxu0 0.0
    %440 = vmatprep.subr.mxu0 0.0
    %441 = vmatpush2.msra.mxu0 0.0
    %442 = vmatprep.mubr.f32.mxu0 0.0
    %443 = vmatmul.mubr.f32.gmra.mxu0 %v234
    %v444 = vpop.f32.mrf.mxu0
    %v445 = vadd.f32 %v216, %v444
    %v446 = vpop.f32.mrf.mxu0
    %v447 = vadd.f32 %v220, %v446
    %448 = vdwg.mxu0
    %449 = vmatprep.subr.mxu0 0.0
    %450 = vmatpush1.msra.mxu0 0.0
    %451 = vmatprep.subr.mxu0 0.0
    %452 = vmatpush1.msra.mxu0 0.0
    %453 = vmatprep.subr.mxu0 0.0
    %454 = vmatpush1.msra.mxu0 0.0
    %455 = vmatprep.subr.mxu0 0.0
    %456 = vmatpush1.msra.mxu0 0.0
    %457 = vmatprep.subr.mxu0 0.0
    %458 = vmatpush1.msra.mxu0 0.0
    %459 = vmatprep.subr.mxu0 0.0
    %460 = vmatpush1.msra.mxu0 0.0
    %461 = vmatprep.subr.mxu0 0.0
    %462 = vmatpush1.msra.mxu0 0.0
    %463 = vmatprep.subr.mxu0 0.0
    %464 = vmatpush1.msra.mxu0 0.0
    %465 = vmatprep.subr.mxu0 0.0
    %466 = vmatpush1.msra.mxu0 0.0
    %467 = vmatprep.subr.mxu0 0.0
    %468 = vmatpush1.msra.mxu0 0.0
    %469 = vmatprep.subr.mxu0 0.0
    %470 = vmatpush1.msra.mxu0 0.0
    %471 = vmatprep.subr.mxu0 0.0
    %472 = vmatpush1.msra.mxu0 0.0
    %473 = vmatprep.subr.mxu0 0.0
    %474 = vmatpush1.msra.mxu0 %v194
    %475 = vmatprep.subr.mxu0 0.0
    %476 = vmatpush1.msra.mxu0 %v187
    %477 = vmatprep.subr.mxu0 0.0
    %478 = vmatpush1.msra.mxu0 %v180
    %479 = vmatprep.subr.mxu0 0.0
    %480 = vmatpush1.msra.mxu0 %v173
    %481 = vmatprep.subr.mxu0 0.0
    %482 = vmatpush2.msra.mxu0 0.0
    %483 = vmatprep.subr.mxu0 0.0
    %484 = vmatpush2.msra.mxu0 0.0
    %485 = vmatprep.subr.mxu0 0.0
    %486 = vmatpush2.msra.mxu0 0.0
    %487 = vmatprep.subr.mxu0 0.0
    %488 = vmatpush2.msra.mxu0 0.0
    %489 = vmatprep.subr.mxu0 0.0
    %490 = vmatpush2.msra.mxu0 0.0
    %491 = vmatprep.subr.mxu0 0.0
    %492 = vmatpush2.msra.mxu0 0.0
    %493 = vmatprep.subr.mxu0 0.0
    %494 = vmatpush2.msra.mxu0 0.0
    %495 = vmatprep.subr.mxu0 0.0
    %496 = vmatpush2.msra.mxu0 0.0
    %497 = vmatprep.subr.mxu0 0.0
    %498 = vmatpush2.msra.mxu0 0.0
    %499 = vmatprep.subr.mxu0 0.0
    %500 = vmatpush2.msra.mxu0 0.0
    %501 = vmatprep.subr.mxu0 0.0
    %502 = vmatpush2.msra.mxu0 0.0
    %503 = vmatprep.subr.mxu0 0.0
    %504 = vmatpush2.msra.mxu0 0.0
    %505 = vmatprep.subr.mxu0 0.0
    %506 = vmatpush2.msra.mxu0 0.0
    %507 = vmatprep.subr.mxu0 0.0
    %508 = vmatpush2.msra.mxu0 0.0
    %509 = vmatprep.subr.mxu0 0.0
    %510 = vmatpush2.msra.mxu0 0.0
    %511 = vmatprep.subr.mxu0 0.0
    %512 = vmatpush2.msra.mxu0 0.0
    %513 = vmatprep.mubr.f32.mxu0 0.0
    %514 = vmatmul.mubr.f32.gmra.mxu0 %v234
    %v515 = vpop.f32.mrf.mxu0
    %v516 = vadd.f32 %v224, %v515
    %v517 = vpop.f32.mrf.mxu0
    %518 = vdwg.mxu0
    %v519 = vmul.f32 %v303, 0.5
    %v520 = vmul.f32 %v305, 0.5
    %v521 = vmul.f32 %v374, 0.5
    %v522 = vmul.f32 %v376, 0.5
    %v523 = vmul.f32 %v445, 0.5
    %v524 = vmul.f32 %v447, 0.5
    %v525 = vmul.f32 %v516, 0.5
    %v526 = vtanh.pop %v519
    %v527 = vtanh.pop %v520
    %v528 = vtanh.pop %v521
    %v529 = vtanh.pop %v522
    %v530 = vtanh.pop %v523
    %v531 = vtanh.pop %v524
    %v532 = vtanh.pop %v525
    %v533 = vmul.f32 %v526, 0.5
    %v534 = vmul.f32 %v527, 0.5
    %v535 = vmul.f32 %v528, 0.5
    %v536 = vmul.f32 %v529, 0.5
    %v537 = vmul.f32 %v530, 0.5
    %v538 = vmul.f32 %v531, 0.5
    %v539 = vmul.f32 %v532, 0.5
    %v540 = vadd.f32 %v533, 0.5
    %v541 = vadd.f32 %v534, 0.5
    %v542 = vadd.f32 %v535, 0.5
    %v543 = vadd.f32 %v536, 0.5
    %v544 = vadd.f32 %v537, 0.5
    %v545 = vadd.f32 %v538, 0.5
    %v546 = vadd.f32 %v539, 0.5
    %547 = vst [vmem:[#allocation10] sm:$0xff] %v540
    %548 = vst [vmem:[#allocation10 + $0x8] sm:$0xff] %v541
    %549 = vst [vmem:[#allocation10 + $0x10] sm:$0xff] %v542
    %550 = vst [vmem:[#allocation10 + $0x18] sm:$0xff] %v543
    %551 = vst [vmem:[#allocation10 + $0x20] sm:$0xff] %v544
    %552 = vst [vmem:[#allocation10 + $0x28] sm:$0xff] %v545
    %vm553 = vcmask 130048
    %554 = vst.msk [vmem:[#allocation10 + $0x30] sm:$0xff] %vm553, %v546
    // Predicated region
    $region38: #{tpu_custom_call.1} parent=1 // pred_check
      _
    $region39: #{tpu_custom_call.1} parent=1 // pred_check_branch
      %556 = sbr.rel (0) target = $region41
    $region40: #{tpu_custom_call.1} parent=1 // pred_region
      %s558 = ssub.s32 896, 896
      %559 = vsyncadd [#allocation4], %s558
      %s561 = sshll.u32 [#allocation10], 4
      %s562 = int_to_ptr.vmem [resolvable:$true] %s561
      %564 = dma.vmem_to_hbm [thread:$0]  %s562, 896, %s5, [#allocation4]
    $region41: #{tpu_custom_call.1} parent=1 // pred_fallthru
      _
    // Predicated region
    $region42: #{tpu_custom_call.1} parent=1 // pred_check
      _
    $region43: #{tpu_custom_call.1} parent=1 // pred_check_branch
      %566 = sbr.rel (0) target = $region45
    $region44: #{tpu_custom_call.1} parent=1 // pred_region
      %567 = dma.done [#allocation4], 896
    $region45: #{tpu_custom_call.1} parent=1 // pred_fallthru
      _
    %568 = vsyncpa [#allocation3], 1
    %569 = vsyncpa [#allocation6], 1
    %570 = vsyncpa [#allocation9], 1
    %571 = vsyncpa [#allocation4], 1

</llo_original>
